<compile_context>
chip_gen: v5e
topology: v5e:2x2
jax: 0.10.0
libtpu: 0.0.40
codegen_flags: <defaults>
</compile_context>

<pallas_src>
import functools

import jax
import jax.numpy as jnp
from jax import lax
from jax.experimental import pallas as pl
from jax.experimental.pallas import tpu as pltpu


def fm_kernel(sparse_ref, embed_ref, w_ref, s_ref, b_ref, out_ref):
    # ---- Linear term on the VPU (lane-dense (1, D) weight row) -------------
    sp = sparse_ref[...].astype(jnp.float32)                        # (tB, D)
    w = w_ref[...]                                                  # (1, D) f32
    lin = jnp.sum(sp * w, axis=-1, keepdims=True) + b_ref[0, 0]     # (tB, 1)

    # ---- FM pairwise-interaction term ---------------------------------------
    # embed arrives flattened to (tB, F*K) (lane-dense).  The per-factor field
    # sum runs on the otherwise idle MXU via a constant 0/1 block-summing
    # matrix S (F*K, K): field_sum[b, k] = sum_f e[b, f, k].
    ef = embed_ref[...]                                             # (tB, F*K)
    s = s_ref[...]                                                  # (F*K, K)
    if ef.dtype == jnp.float32:
        field_sum = jnp.dot(ef, s,
                            precision=lax.Precision.HIGHEST,
                            preferred_element_type=jnp.float32)     # (tB, K)
    else:  # bf16 inputs: native MXU bf16 path, exact f32 accumulation
        field_sum = jnp.dot(ef, s, preferred_element_type=jnp.float32)

    ef32 = ef.astype(jnp.float32)
    square_of_sum = jnp.sum(field_sum * field_sum, axis=-1, keepdims=True)  # (tB,1)
    sum_of_square = jnp.sum(ef32 * ef32, axis=-1, keepdims=True)            # (tB,1)
    fm = 0.5 * (square_of_sum - sum_of_square)                              # (tB,1)

    out_ref[...] = (lin + fm).astype(out_ref.dtype)


def _round_up(x, m):
    return ((x + m - 1) // m) * m


def _vmem_capacity_bytes():
    # Trace-time hardware query; conservative (v7x per-TC) fallback.
    try:
        return int(pltpu.get_tpu_info().vmem_capacity_bytes)
    except Exception:
        return 64 * 1024 * 1024


def _choose_tile_b(batch, d, fk, k, sp_item, em_item, requested_tile_b):
    """Pick a 32-aligned batch tile from a generation-aware, padding-aware
    double-buffered VMEM budget.  Returns (tile_b, vmem_budget_bytes)."""
    cap = _vmem_capacity_bytes()
    # Half of physical VMEM: 64 MiB on v5e/v6e (128 MiB), 32 MiB per-TC on v7x.
    budget = min(cap // 2, 64 * 1024 * 1024)

    d_pad = _round_up(d, 128)
    fk_pad = _round_up(fk, 128)
    k_pad = _round_up(k, 128)

    # Resident (grid-invariant) weight + S, double-buffered by the pipeline.
    resident = 2 * (8 * d_pad * 4 + _round_up(fk, 8) * k_pad * em_item)
    # Per-row double-buffered footprint: both inputs + 128-lane padded f32 out.
    row_bytes = 2 * (d_pad * sp_item + fk_pad * em_item + 128 * 4)

    avail = max(budget - resident, 1 << 20)
    tb = min(requested_tile_b, max(32, (avail // row_bytes) // 32 * 32))
    # v7x megacore: keep >= 2 "parallel" tiles when batch allows (free on v5e/v6e).
    tb = min(tb, max(32, _round_up(pl.cdiv(batch, 2), 32)))
    tb = max(32, (tb // 32) * 32)
    return tb, budget


@functools.partial(jax.jit, static_argnames=("tile_b",))
def fm_component(sparse_x, embed_x, weight, bias, *, tile_b=1024):
    """Pallas FM component.  Returns (B,) float32, matching the torch forward.

    sparse_x : (B, D)    multihot vector (f32 / bf16 / bool / int)
    embed_x  : (B, F, K) embedded field vectors (f32 or bf16)
    weight   : (D, 1)    f32 linear weight (torch nn.Linear(D,1).weight.T)
    bias     : (1,)      f32 linear bias
    """
    B, D = sparse_x.shape
    _, F, K = embed_x.shape
    FK = F * K

    # 0/1 multihot: carry integer/bool inputs as int8 to shrink the HBM stream.
    if (jnp.issubdtype(sparse_x.dtype, jnp.bool_)
            or jnp.issubdtype(sparse_x.dtype, jnp.integer)):
        sparse_x = sparse_x.astype(jnp.int8)

    em_dtype = embed_x.dtype
    sp_item = jnp.dtype(sparse_x.dtype).itemsize
    em_item = jnp.dtype(em_dtype).itemsize

    # Lane-dense parameter layouts.
    w_row = weight.reshape(1, D).astype(jnp.float32)                  # (1, D)
    b_sc = jnp.asarray(bias, jnp.float32).reshape(1, 1)               # (1, 1)
    # 0/1 block-summing matrix: S[f*K + k, k] = 1.
    s_mat = jnp.tile(jnp.eye(K, dtype=jnp.float32), (F, 1)).astype(em_dtype)

    # Flatten embeddings so the whole F*K extent sits on the lane axis.
    embed_flat = embed_x.reshape(B, FK)

    tb, budget = _choose_tile_b(B, D, FK, K, sp_item, em_item, tile_b)
    num_tiles = pl.cdiv(B, tb)   # ragged last block handled by Pallas (no jnp.pad)

    cost = pl.CostEstimate(
        flops=2 * B * FK * K + 6 * B * FK + 2 * B * D,
        transcendentals=0,
        bytes_accessed=B * (D * sp_item + FK * em_item + 4)
                       + D * 4 + FK * K * em_item + 4,
    )

    out = pl.pallas_call(
        fm_kernel,
        out_shape=jax.ShapeDtypeStruct((B, 1), jnp.float32),
        grid=(num_tiles,),
        in_specs=[
            pl.BlockSpec((tb, D), lambda i: (i, 0)),                 # sparse tile
            pl.BlockSpec((tb, FK), lambda i: (i, 0)),                # embed tile
            pl.BlockSpec((1, D), lambda i: (0, 0)),                  # weight (resident)
            pl.BlockSpec((FK, K), lambda i: (0, 0)),                 # S (resident)
            pl.BlockSpec((1, 1), lambda i: (0, 0),
                         memory_space=pltpu.MemorySpace.SMEM),       # bias scalar
        ],
        out_specs=pl.BlockSpec((tb, 1), lambda i: (i, 0)),
        compiler_params=pltpu.CompilerParams(
            dimension_semantics=("parallel",),
            vmem_limit_bytes=min(budget + 16 * 1024 * 1024, 112 * 1024 * 1024),
        ),
        cost_estimate=cost,
    )(sparse_x, embed_flat, w_row, s_mat, b_sc)

    return out[:, 0]


def fm_reference(sparse_x, embed_x, weight, bias):
    """Pure-jnp reference (no matmuls, so f32-exact regardless of dot precision)."""
    lin = jnp.sum(sparse_x * weight.reshape(1, -1), axis=-1) + bias.reshape(())[()]
    square_of_sum = jnp.sum(embed_x, axis=1) ** 2
    sum_of_square = jnp.sum(embed_x ** 2, axis=1)
    fm = 0.5 * jnp.sum(square_of_sum - sum_of_square, axis=1)
    return lin + fm


if __name__ == "__main__":
    B, D, F, K = 128, 32, 4, 8

    key = jax.random.PRNGKey(0)
    k_sparse, k_embed, k_w = jax.random.split(key, 3)

    # Inputs.
    sparse_f32 = (jax.random.uniform(k_sparse, (B, D)) > 0.7).astype(jnp.float32)
    embed_f32 = jax.random.normal(k_embed, (B, F, K), dtype=jnp.float32)

    # Parameters: torch uses nn.init.uniform_ (U[0,1)) for weight, zeros for bias.
    # (Nonzero bias used here purely to exercise the bias-add path.)
    weight = jax.random.uniform(k_w, (D, 1), dtype=jnp.float32)
    bias = jnp.full((1,), 0.25, dtype=jnp.float32)

    # 1) f32 path (tile chooser caps tb at cdiv(B,2) -> 2 parallel tiles).
    out = fm_component(sparse_f32, embed_f32, weight, bias)
    jax.block_until_ready(out)
    ref = fm_reference(sparse_f32, embed_f32, weight, bias)
    assert out.shape == (B,)
    assert jnp.allclose(out, ref, atol=1e-4, rtol=1e-4), (out, ref)

    # 2) compact-input path: int8 multihot + bf16 embeddings (min HBM bytes).
    sp8 = sparse_f32.astype(jnp.int8)
    em16 = embed_f32.astype(jnp.bfloat16)
    out16 = fm_component(sp8, em16, weight, bias)
    jax.block_until_ready(out16)
    ref16 = fm_reference(sp8.astype(jnp.float32), em16.astype(jnp.float32),
                         weight, bias)
    assert jnp.allclose(out16, ref16, atol=1e-3, rtol=1e-3), (out16, ref16)

    # 3) ragged batch (no jnp.pad; Pallas masks the partial last block).
    Br = 100
    outr = fm_component(sparse_f32[:Br], embed_f32[:Br], weight, bias)
    jax.block_until_ready(outr)
    refr = fm_reference(sparse_f32[:Br], embed_f32[:Br], weight, bias)
    assert outr.shape == (Br,)
    assert jnp.allclose(outr, refr, atol=1e-4, rtol=1e-4), (outr, refr)

    print("KERNEL_OK")
</pallas_src>

<mosaic_0001>
module attributes {stable_mosaic.version = 11 : i64} {
  func.func @fm_kernel(%arg0: i32, %arg1: memref<64x32xf32, #tpu.memory_space<vmem>>, %arg2: memref<64x32xf32, #tpu.memory_space<vmem>>, %arg3: memref<1x32xf32, #tpu.memory_space<vmem>>, %arg4: memref<32x8xf32, #tpu.memory_space<vmem>>, %arg5: memref<1x1xf32, #tpu.memory_space<smem>>, %arg6: memref<64x1xf32, #tpu.memory_space<vmem>>) attributes {dimension_semantics = [#tpu.dimension_semantics<parallel>], iteration_bounds = array<i64: 2>, scalar_prefetch = 0 : i64, scratch_operands = 0 : i64, tpu.core_type = #tpu.core_type<tc>, window_params = [{transform_indices = @transform_0, window_bounds = array<i64: 64, 32>}, {transform_indices = @transform_1, window_bounds = array<i64: 64, 32>}, {pipeline_mode = #tpu.pipeline_mode<synchronous>, transform_indices = @transform_2, window_bounds = array<i64: 1, 32>}, {pipeline_mode = #tpu.pipeline_mode<synchronous>, transform_indices = @transform_3, window_bounds = array<i64: 32, 8>}, {transform_indices = @transform_4, window_bounds = array<i64: 1, 1>}, {transform_indices = @transform_5, window_bounds = array<i64: 64, 1>}]} {
    %c0 = arith.constant 0 : index
    %c0_0 = arith.constant 0 : index
    %0 = vector.load %arg1[%c0, %c0_0] : memref<64x32xf32, #tpu.memory_space<vmem>>, vector<64x32xf32>
    %c0_1 = arith.constant 0 : index
    %c0_2 = arith.constant 0 : index
    %1 = vector.load %arg3[%c0_1, %c0_2] : memref<1x32xf32, #tpu.memory_space<vmem>>, vector<1x32xf32>
    %2 = vector.broadcast %1 : vector<1x32xf32> to vector<64x32xf32>
    %3 = arith.mulf %0, %2 : vector<64x32xf32>
    %cst = arith.constant dense<0.000000e+00> : vector<64xf32>
    %4 = vector.multi_reduction <add>, %3, %cst [1] : vector<64x32xf32> to vector<64xf32>
    %5 = vector.shape_cast %4 : vector<64xf32> to vector<64x1xf32>
    %c0_3 = arith.constant 0 : index
    %c0_4 = arith.constant 0 : index
    %6 = memref.load %arg5[%c0_3, %c0_4] : memref<1x1xf32, #tpu.memory_space<smem>>
    %7 = vector.broadcast %6 : f32 to vector<64x1xf32>
    %8 = arith.addf %5, %7 : vector<64x1xf32>
    %c0_5 = arith.constant 0 : index
    %c0_6 = arith.constant 0 : index
    %9 = vector.load %arg2[%c0_5, %c0_6] : memref<64x32xf32, #tpu.memory_space<vmem>>, vector<64x32xf32>
    %c0_7 = arith.constant 0 : index
    %c0_8 = arith.constant 0 : index
    %10 = vector.load %arg4[%c0_7, %c0_8] : memref<32x8xf32, #tpu.memory_space<vmem>>, vector<32x8xf32>
    %cst_9 = arith.constant dense<0.000000e+00> : vector<64x8xf32>
    %11 = tpu.matmul %9, %10, %cst_9 {dimension_numbers = #tpu.dot_dimension_numbers<[1], [0], [0], [1], [0, 0, 1, 1], [], []>, precision = #tpu.contract_precision<fp32>} : vector<64x32xf32>, vector<32x8xf32>, vector<64x8xf32> -> vector<64x8xf32>
    %12 = arith.mulf %11, %11 : vector<64x8xf32>
    %cst_10 = arith.constant dense<0.000000e+00> : vector<64xf32>
    %13 = vector.multi_reduction <add>, %12, %cst_10 [1] : vector<64x8xf32> to vector<64xf32>
    %14 = vector.shape_cast %13 : vector<64xf32> to vector<64x1xf32>
    %15 = arith.mulf %9, %9 : vector<64x32xf32>
    %cst_11 = arith.constant dense<0.000000e+00> : vector<64xf32>
    %16 = vector.multi_reduction <add>, %15, %cst_11 [1] : vector<64x32xf32> to vector<64xf32>
    %17 = vector.shape_cast %16 : vector<64xf32> to vector<64x1xf32>
    %18 = arith.subf %14, %17 : vector<64x1xf32>
    %cst_12 = arith.constant 5.000000e-01 : f32
    %19 = vector.broadcast %cst_12 : f32 to vector<64x1xf32>
    %20 = arith.mulf %19, %18 : vector<64x1xf32>
    %21 = arith.addf %8, %20 : vector<64x1xf32>
    %c0_13 = arith.constant 0 : index
    %c0_14 = arith.constant 0 : index
    %22 = vector.load %arg6[%c0_13, %c0_14] : memref<64x1xf32, #tpu.memory_space<vmem>>, vector<64x1xf32>
    tpu.vector_store %arg6[%c0_13, %c0_14], %21 {strides = array<i32>} : memref<64x1xf32, #tpu.memory_space<vmem>>, vector<64x1xf32>,
    return
  }
  func.func @transform_0(%arg0: i32) -> (i32, i32) {
    %c0_i32 = arith.constant 0 : i32
    %c0_i32_0 = arith.constant 0 : i32
    return %arg0, %c0_i32 : i32, i32
  }
  func.func @transform_1(%arg0: i32) -> (i32, i32) {
    %c0_i32 = arith.constant 0 : i32
    %c0_i32_0 = arith.constant 0 : i32
    return %arg0, %c0_i32 : i32, i32
  }
  func.func @transform_2(%arg0: i32) -> (i32, i32) {
    %c0_i32 = arith.constant 0 : i32
    %c0_i32_0 = arith.constant 0 : i32
    %c0_i32_1 = arith.constant 0 : i32
    return %c0_i32, %c0_i32_0 : i32, i32
  }
  func.func @transform_3(%arg0: i32) -> (i32, i32) {
    %c0_i32 = arith.constant 0 : i32
    %c0_i32_0 = arith.constant 0 : i32
    %c0_i32_1 = arith.constant 0 : i32
    return %c0_i32, %c0_i32_0 : i32, i32
  }
  func.func @transform_4(%arg0: i32) -> (i32, i32) {
    %c0_i32 = arith.constant 0 : i32
    %c0_i32_0 = arith.constant 0 : i32
    %c0_i32_1 = arith.constant 0 : i32
    return %c0_i32, %c0_i32_0 : i32, i32
  }
  func.func @transform_5(%arg0: i32) -> (i32, i32) {
    %c0_i32 = arith.constant 0 : i32
    %c0_i32_0 = arith.constant 0 : i32
    return %arg0, %c0_i32 : i32, i32
  }
}

</mosaic_0001>

<llo_original>
// kernel: fm_component.1
$region0: #{fm_component.1}
  #allocation0 [shape = 'u32[]', space=smem, size = 0x4, offset = 0x4, fixed_abs, tag = 'smem constant byte address 0x4 - core index']
  #allocation1 [shape = 'u32[72,128]{1,0:T(1,128)}', space=vmem, size = 0x9000, scoped, tag = 'internal scratch']
  #allocation2 [shape = 'f32[1,1]{1,0:T(1,128)S(6)}', space=smem, size = 0x200, scoped, tag = 'scoped memory for fm_component.1']
  %s0 = inlined_call_operand.vmem [shape: f32[128,32], index: 0, kind: input, shape index: {}]
  %s1 = inlined_call_operand.vmem [shape: f32[128,32], index: 1, kind: input, shape index: {}]
  %s2 = inlined_call_operand.vmem [shape: f32[1,32], index: 2, kind: input, shape index: {}]
  %s3 = inlined_call_operand.vmem [shape: f32[32,8], index: 3, kind: input, shape index: {}]
  %s4 = inlined_call_operand.<no memory space> [shape: f32[1,1], index: 4, kind: input, shape index: {}]
  %s5 = inlined_call_operand.vmem [shape: f32[128,1], index: 5, kind: output, shape index: {}]
  %s6 = sld [smem:[#allocation0]]
  $region53: #{fm_component.1} parent=0
    _
  %s8 = ssub.s32 1, %s6
  %s9 = scalar_select 0, %s8, %s6
  %10 = sst [smem:[#allocation2]] %s4
  loop: start=0, step=1, limit=4
  $region2: #{fm_component.1} parent=0 // loop_pre_header
    _
  $region3: #{fm_component.1} parent=0 // loop_header
    %s12 = sphi 0, %s16
    %p13 = scmp.ge.s32.totalorder %s12, 4
    %s22 = sphi 0, %s24
    %s25 = sphi 0, %s22
    %s26 = sphi 0, %s25
    %s42 = sphi 0, %s26
    %s48 = sphi 0, %s50
    %s51 = sphi 0, %s48
    %s52 = sphi 0, %s51
    %s68 = sphi 0, %s52
    %s72 = sphi 0, %s72
    %s74 = sphi 0, %s72
    %s75 = sphi 0, %s74
    %s89 = sphi 0, %s75
    %s93 = sphi 0, %s93
    %s95 = sphi 0, %s93
    %s96 = sphi 0, %s95
    %s110 = sphi 0, %s96
    %s114 = sphi 0, %s114
    %s116 = sphi 0, %s114
    %s117 = sphi 0, %s116
    %s131 = sphi 0, %s117
    %s137 = sphi 0, %s139
    %s140 = sphi 0, %s137
    %s141 = sphi 0, %s140
    %s157 = sphi 0, %s141
  $region4: #{fm_component.1} parent=0 // loop_header_branch
    %15 = sbr.rel (%p13) target = $region8
  $region5: #{fm_component.1} parent=0 // loop_body
    %s17 = ssub.s32 %s12, 1
    %s18 = ssub.s32 %s12, 2
    %s19 = sadd.s32 %s12, 1
    %s20 = ssub.s32 %s12, %s19
    %p21 = scmp.eq.s32.totalorder %s20, 0
    %s23 = sadd.s32 %s22, 1
    %s24 = scalar_select %p21, %s22, %s23
    %p27 = pneg %p21
    %p28 = scmp.eq.s32.totalorder %s12, 1
    %p29 = por %p27, %p28
    %p30 = scmp.ne.s32.totalorder %s22, %s25
    %p31 = scmp.eq.s32.totalorder %s12, 0
    %p32 = por %p30, %p31
    %p33 = scmp.ne.s32.totalorder %s22, %s25
    %p34 = scmp.eq.s32.totalorder %s17, 1
    %p35 = por %p33, %p34
    %p36 = scmp.ne.s32.totalorder %s25, %s26
    %p37 = scmp.eq.s32.totalorder %s17, 0
    %p38 = por %p36, %p37
    %p39 = scmp.ne.s32.totalorder %s25, %s26
    %p40 = scmp.eq.s32.totalorder %s18, 1
    %p41 = por %p39, %p40
    %p43 = scmp.ne.s32.totalorder %s26, %s42
    %p44 = scmp.eq.s32.totalorder %s18, 0
    %p45 = por %p43, %p44
    %s46 = ssub.s32 %s12, %s19
    %p47 = scmp.eq.s32.totalorder %s46, 0
    %s49 = sadd.s32 %s48, 1
    %s50 = scalar_select %p47, %s48, %s49
    %p53 = pneg %p47
    %p54 = scmp.eq.s32.totalorder %s12, 1
    %p55 = por %p53, %p54
    %p56 = scmp.ne.s32.totalorder %s48, %s51
    %p57 = scmp.eq.s32.totalorder %s12, 0
    %p58 = por %p56, %p57
    %p59 = scmp.ne.s32.totalorder %s48, %s51
    %p60 = scmp.eq.s32.totalorder %s17, 1
    %p61 = por %p59, %p60
    %p62 = scmp.ne.s32.totalorder %s51, %s52
    %p63 = scmp.eq.s32.totalorder %s17, 0
    %p64 = por %p62, %p63
    %p65 = scmp.ne.s32.totalorder %s51, %s52
    %p66 = scmp.eq.s32.totalorder %s18, 1
    %p67 = por %p65, %p66
    %p69 = scmp.ne.s32.totalorder %s52, %s68
    %p70 = scmp.eq.s32.totalorder %s18, 0
    %p71 = por %p69, %p70
    %s73 = sadd.s32 %s72, 1
    %p76 = scmp.eq.s32.totalorder %s12, 1
    %p77 = scmp.ne.s32.totalorder %s72, %s74
    %p78 = scmp.eq.s32.totalorder %s12, 0
    %p79 = por %p77, %p78
    %p80 = scmp.ne.s32.totalorder %s72, %s74
    %p81 = scmp.eq.s32.totalorder %s17, 1
    %p82 = por %p80, %p81
    %p83 = scmp.ne.s32.totalorder %s74, %s75
    %p84 = scmp.eq.s32.totalorder %s17, 0
    %p85 = por %p83, %p84
    %p86 = scmp.ne.s32.totalorder %s74, %s75
    %p87 = scmp.eq.s32.totalorder %s18, 1
    %p88 = por %p86, %p87
    %p90 = scmp.ne.s32.totalorder %s75, %s89
    %p91 = scmp.eq.s32.totalorder %s18, 0
    %p92 = por %p90, %p91
    %s94 = sadd.s32 %s93, 1
    %p97 = scmp.eq.s32.totalorder %s12, 1
    %p98 = scmp.ne.s32.totalorder %s93, %s95
    %p99 = scmp.eq.s32.totalorder %s12, 0
    %p100 = por %p98, %p99
    %p101 = scmp.ne.s32.totalorder %s93, %s95
    %p102 = scmp.eq.s32.totalorder %s17, 1
    %p103 = por %p101, %p102
    %p104 = scmp.ne.s32.totalorder %s95, %s96
    %p105 = scmp.eq.s32.totalorder %s17, 0
    %p106 = por %p104, %p105
    %p107 = scmp.ne.s32.totalorder %s95, %s96
    %p108 = scmp.eq.s32.totalorder %s18, 1
    %p109 = por %p107, %p108
    %p111 = scmp.ne.s32.totalorder %s96, %s110
    %p112 = scmp.eq.s32.totalorder %s18, 0
    %p113 = por %p111, %p112
    %s115 = sadd.s32 %s114, 1
    %p118 = scmp.eq.s32.totalorder %s12, 1
    %p119 = scmp.ne.s32.totalorder %s114, %s116
    %p120 = scmp.eq.s32.totalorder %s12, 0
    %p121 = por %p119, %p120
    %p122 = scmp.ne.s32.totalorder %s114, %s116
    %p123 = scmp.eq.s32.totalorder %s17, 1
    %p124 = por %p122, %p123
    %p125 = scmp.ne.s32.totalorder %s116, %s117
    %p126 = scmp.eq.s32.totalorder %s17, 0
    %p127 = por %p125, %p126
    %p128 = scmp.ne.s32.totalorder %s116, %s117
    %p129 = scmp.eq.s32.totalorder %s18, 1
    %p130 = por %p128, %p129
    %p132 = scmp.ne.s32.totalorder %s117, %s131
    %p133 = scmp.eq.s32.totalorder %s18, 0
    %p134 = por %p132, %p133
    %s135 = ssub.s32 %s12, %s19
    %p136 = scmp.eq.s32.totalorder %s135, 0
    %s138 = sadd.s32 %s137, 1
    %s139 = scalar_select %p136, %s137, %s138
    %p142 = pneg %p136
    %p143 = scmp.eq.s32.totalorder %s12, 1
    %p144 = por %p142, %p143
    %p145 = scmp.ne.s32.totalorder %s137, %s140
    %p146 = scmp.eq.s32.totalorder %s12, 0
    %p147 = por %p145, %p146
    %p148 = scmp.ne.s32.totalorder %s137, %s140
    %p149 = scmp.eq.s32.totalorder %s17, 1
    %p150 = por %p148, %p149
    %p151 = scmp.ne.s32.totalorder %s140, %s141
    %p152 = scmp.eq.s32.totalorder %s17, 0
    %p153 = por %p151, %p152
    %p154 = scmp.ne.s32.totalorder %s140, %s141
    %p155 = scmp.eq.s32.totalorder %s18, 1
    %p156 = por %p154, %p155
    %p158 = scmp.ne.s32.totalorder %s141, %s157
    %p159 = scmp.eq.s32.totalorder %s18, 0
    %p160 = por %p158, %p159
    %p161 = scmp.le.s32.totalorder 1, %s12
    %p162 = scmp.lt.s32.totalorder %s12, 3
    %p163 = pnand %p161, %p162
    %p164 = pneg %p163
    // Predicated region
    $region9: #{fm_component.1} parent=5 // pred_check
      _
    $region10: #{fm_component.1} parent=5 // pred_check_branch
      %166 = sbr.rel (%p163) target = $region12
    $region11: #{fm_component.1} parent=5 // pred_region
      %s167 = ssub.s32 %s12, 1
      // Predicated region
      $region13: #{fm_component.1} parent=11 // pred_check
        %p168 = pneg %p85
      $region14: #{fm_component.1} parent=11 // pred_check_branch
        %170 = sbr.rel (%p168) target = $region16
      $region15: #{fm_component.1} parent=11 // pred_region
        _
      $region16: #{fm_component.1} parent=11 // pred_fallthru
        _
      // Predicated region
      $region17: #{fm_component.1} parent=11 // pred_check
        %p171 = pneg %p106
      $region18: #{fm_component.1} parent=11 // pred_check_branch
        %173 = sbr.rel (%p171) target = $region20
      $region19: #{fm_component.1} parent=11 // pred_region
        _
      $region20: #{fm_component.1} parent=11 // pred_fallthru
        _
      // Predicated region
      $region21: #{fm_component.1} parent=11 // pred_check
        %p174 = pneg %p127
      $region22: #{fm_component.1} parent=11 // pred_check_branch
        %176 = sbr.rel (%p174) target = $region24
      $region23: #{fm_component.1} parent=11 // pred_region
        _
      $region24: #{fm_component.1} parent=11 // pred_fallthru
        _
    $region12: #{fm_component.1} parent=5 // pred_fallthru
      _
    %p177 = scmp.lt.s32.totalorder %s12, 2
    // Predicated region
    $region25: #{fm_component.1} parent=5 // pred_check
      %p178 = pneg %p177
    $region26: #{fm_component.1} parent=5 // pred_check_branch
      %180 = sbr.rel (%p178) target = $region28
    $region27: #{fm_component.1} parent=5 // pred_region
      // Predicated region
      $region29: #{fm_component.1} parent=27 // pred_check
        %p181 = pneg %p32
      $region30: #{fm_component.1} parent=27 // pred_check_branch
        %183 = sbr.rel (%p181) target = $region32
      $region31: #{fm_component.1} parent=27 // pred_region
        %s184 = smul.u32 8, %s12
        %p185 = scmp.lt.s32.totalorder %s184, 15
        %s186 = scalar_select %p185, %s184, 15
        %s187 = smul.addr %s186, 8
        %s188 = scalar_lea.vmem %s0, %s187
        %s189 = smul.u32 8, %s12
      $region32: #{fm_component.1} parent=27 // pred_fallthru
        _
      // Predicated region
      $region33: #{fm_component.1} parent=27 // pred_check
        %p190 = pneg %p58
      $region34: #{fm_component.1} parent=27 // pred_check_branch
        %192 = sbr.rel (%p190) target = $region36
      $region35: #{fm_component.1} parent=27 // pred_region
        %s193 = smul.u32 8, %s12
        %p194 = scmp.lt.s32.totalorder %s193, 15
        %s195 = scalar_select %p194, %s193, 15
        %s196 = smul.addr %s195, 8
        %s197 = scalar_lea.vmem %s1, %s196
        %s198 = smul.u32 8, %s12
      $region36: #{fm_component.1} parent=27 // pred_fallthru
        _
    $region28: #{fm_component.1} parent=5 // pred_fallthru
      _
    %p199 = scmp.le.s32.totalorder 1, %s12
    %p200 = scmp.lt.s32.totalorder %s12, 3
    %p201 = pnand %p199, %p200
    %p202 = pneg %p201
    // Predicated region
    $region37: #{fm_component.1} parent=5 // pred_check
      _
    $region38: #{fm_component.1} parent=5 // pred_check_branch
      %204 = sbr.rel (%p201) target = $region40
    $region39: #{fm_component.1} parent=5 // pred_region
      %s205 = ssub.s32 %s12, 1
      %s206 = smul.u32 8, %s17
      %p207 = scmp.lt.s32.totalorder %s206, 15
      %s208 = scalar_select %p207, %s206, 15
      %s209 = smul.addr %s208, 8
      %s210 = scalar_lea.vmem %s0, %s209
      %p211 = pneg %p38
      %p212 = pneg %p35
      %s213 = smul.u32 8, %s17
      %p214 = scmp.lt.s32.totalorder %s213, 15
      %s215 = scalar_select %p214, %s213, 15
      %s216 = smul.addr %s215, 8
      %s217 = scalar_lea.vmem %s1, %s216
      %p218 = pneg %p64
      %p219 = pneg %p61
      %p220 = pneg %p85
      %p221 = pneg %p82
      %p222 = pneg %p106
      %p223 = pneg %p103
      %p224 = pneg %p127
      %p225 = pneg %p124
      %p226 = pneg %p153
      %p227 = pneg %p150
      %s228 = smul.u32 8, %s17
      %p229 = scmp.lt.s32.totalorder %s228, 15
      %s230 = scalar_select %p229, %s228, 15
      %s231 = smul.addr %s230, 8
      %s232 = scalar_lea.vmem %s5, %s231
      %s233 = smul.u32 8, %s17
      %p234 = scmp.lt.s32.totalorder %s233, 15
      %s235 = scalar_select %p234, %s233, 15
      %s236 = smul.addr %s235, 8
      %s237 = scalar_lea.vmem %s0, %s236
      %s238 = smul.u32 8, %s17
      %s239 = smul.u32 8, %s17
      %p240 = scmp.lt.s32.totalorder %s239, 15
      %s241 = scalar_select %p240, %s239, 15
      %s242 = smul.addr %s241, 8
      %s243 = scalar_lea.vmem %s1, %s242
      %s244 = smul.u32 8, %s17
      %s245 = smul.u32 8, %s17
      %p246 = scmp.lt.s32.totalorder %s245, 15
      %s247 = scalar_select %p246, %s245, 15
      %s248 = smul.addr %s247, 8
      %s249 = scalar_lea.vmem %s5, %s248
      %s250 = smul.u32 8, %s17
      %v251 = vld [vmem:[%s237] sm:$0xff]
      %v252 = vld [vmem:[%s237 + $0x8] sm:$0xff]
      %v253 = vld [vmem:[%s237 + $0x10] sm:$0xff]
      %v254 = vld [vmem:[%s237 + $0x18] sm:$0xff]
      %v255 = vld [vmem:[%s237 + $0x20] sm:$0xff]
      %v256 = vld [vmem:[%s237 + $0x28] sm:$0xff]
      %v257 = vld [vmem:[%s237 + $0x30] sm:$0xff]
      %v258 = vld [vmem:[%s237 + $0x38] sm:$0xff]
      %v259 = vld [vmem:[%s2] sm:$0x1]
      %v261 = vperm.slane %v259, 0
      %v263 = vmul.f32 %v251, %v261
      %v264 = vmul.f32 %v252, %v261
      %v265 = vmul.f32 %v253, %v261
      %v266 = vmul.f32 %v254, %v261
      %v267 = vmul.f32 %v255, %v261
      %v268 = vmul.f32 %v256, %v261
      %v269 = vmul.f32 %v257, %v261
      %v270 = vmul.f32 %v258, %v261
      %vm271 = vcmask 261120
      %v272 = vsel %vm271, %v263, 0.0
      %273 = vadd.xlane.f32.xlu0 %v272
      %v274 = vpop.xlane.xlu0 %273
      %v275 = vsel %vm271, %v264, 0.0
      %276 = vadd.xlane.f32.xlu0 %v275
      %v277 = vpop.xlane.xlu0 %276
      %v278 = vsel %vm271, %v265, 0.0
      %279 = vadd.xlane.f32.xlu0 %v278
      %v280 = vpop.xlane.xlu0 %279
      %v281 = vsel %vm271, %v266, 0.0
      %282 = vadd.xlane.f32.xlu0 %v281
      %v283 = vpop.xlane.xlu0 %282
      %v284 = vsel %vm271, %v267, 0.0
      %285 = vadd.xlane.f32.xlu0 %v284
      %v286 = vpop.xlane.xlu0 %285
      %v287 = vsel %vm271, %v268, 0.0
      %288 = vadd.xlane.f32.xlu0 %v287
      %v289 = vpop.xlane.xlu0 %288
      %v290 = vsel %vm271, %v269, 0.0
      %291 = vadd.xlane.f32.xlu0 %v290
      %v292 = vpop.xlane.xlu0 %291
      %v293 = vsel %vm271, %v270, 0.0
      %294 = vadd.xlane.f32.xlu0 %v293
      %v295 = vpop.xlane.xlu0 %294
      %s296 = sld [smem:[#allocation2]]
      %v297 = vstv %s296
      %v298 = vadd.f32 %v274, %v297
      %v299 = vadd.f32 %v277, %v297
      %v300 = vadd.f32 %v280, %v297
      %v301 = vadd.f32 %v283, %v297
      %v302 = vadd.f32 %v286, %v297
      %v303 = vadd.f32 %v289, %v297
      %v304 = vadd.f32 %v292, %v297
      %v305 = vadd.f32 %v295, %v297
      %v306 = vld [vmem:[%s243] sm:$0xff]
      %v307 = vld [vmem:[%s243 + $0x8] sm:$0xff]
      %v308 = vld [vmem:[%s243 + $0x10] sm:$0xff]
      %v309 = vld [vmem:[%s243 + $0x18] sm:$0xff]
      %v310 = vld [vmem:[%s243 + $0x20] sm:$0xff]
      %v311 = vld [vmem:[%s243 + $0x28] sm:$0xff]
      %v312 = vld [vmem:[%s243 + $0x30] sm:$0xff]
      %v313 = vld [vmem:[%s243 + $0x38] sm:$0xff]
      %v314 = vld [vmem:[%s3] sm:$0xff]
      %v315 = vld [vmem:[%s3 + $0x8] sm:$0xff]
      %v316 = vld [vmem:[%s3 + $0x10] sm:$0xff]
      %v317 = vld [vmem:[%s3 + $0x18] sm:$0xff]
      %v319 = vsel %vm271, %v306, 0
      %v322 = vsel %vm271, %v307, 0
      %v325 = vsel %vm271, %v308, 0
      %v328 = vsel %vm271, %v309, 0
      %v331 = vsel %vm271, %v310, 0
      %v334 = vsel %vm271, %v311, 0
      %v337 = vsel %vm271, %v312, 0
      %v340 = vsel %vm271, %v313, 0
      %342 = vmatpush.msra.mxu0 0.0
      %343 = vmatpush.msra.mxu0 0.0
      %344 = vmatpush.msra.mxu0 0.0
      %345 = vmatpush.msra.mxu0 0.0
      %346 = vmatpush.msra.mxu0 0.0
      %347 = vmatpush.msra.mxu0 0.0
      %348 = vmatpush.msra.mxu0 0.0
      %349 = vmatpush.msra.mxu0 0.0
      %350 = vmatpush.msra.mxu0 0.0
      %351 = vmatpush.msra.mxu0 0.0
      %352 = vmatpush.msra.mxu0 0.0
      %353 = vmatpush.msra.mxu0 0.0
      %v354 = vand.u32 %v317, 4294901760
      %355 = vmatpush.msra.mxu0 %v354
      %v356 = vand.u32 %v316, 4294901760
      %357 = vmatpush.msra.mxu0 %v356
      %v358 = vand.u32 %v315, 4294901760
      %359 = vmatpush.msra.mxu0 %v358
      %v360 = vand.u32 %v314, 4294901760
      %361 = vmatpush.msra.mxu0 %v360
      %v362 = vand.u32 %v319, 4294901760
      %v363 = vsub.f32 %v319, %v362
      %v364 = vand.u32 %v363, 4294901760
      %v365 = vsub.f32 %v363, %v364
      %v366 = vand.u32 %v365, 4294901760
      %367 = vmatmul.f32.gmra.mxu0 %v366
      %v368 = vpop.f32.mrf.mxu0
      %v369 = vadd.f32 0.0, %v368
      %v370 = vand.u32 %v322, 4294901760
      %v371 = vsub.f32 %v322, %v370
      %v372 = vand.u32 %v371, 4294901760
      %v373 = vsub.f32 %v371, %v372
      %v374 = vand.u32 %v373, 4294901760
      %375 = vmatmul.f32.gmra.mxu0 %v374
      %v376 = vpop.f32.mrf.mxu0
      %v377 = vadd.f32 0.0, %v376
      %v378 = vand.u32 %v325, 4294901760
      %v379 = vsub.f32 %v325, %v378
      %v380 = vand.u32 %v379, 4294901760
      %v381 = vsub.f32 %v379, %v380
      %v382 = vand.u32 %v381, 4294901760
      %383 = vmatmul.f32.gmra.mxu0 %v382
      %v384 = vpop.f32.mrf.mxu0
      %v385 = vadd.f32 0.0, %v384
      %v386 = vand.u32 %v328, 4294901760
      %v387 = vsub.f32 %v328, %v386
      %v388 = vand.u32 %v387, 4294901760
      %v389 = vsub.f32 %v387, %v388
      %v390 = vand.u32 %v389, 4294901760
      %391 = vmatmul.f32.gmra.mxu0 %v390
      %v392 = vpop.f32.mrf.mxu0
      %v393 = vadd.f32 0.0, %v392
      %v394 = vand.u32 %v331, 4294901760
      %v395 = vsub.f32 %v331, %v394
      %v396 = vand.u32 %v395, 4294901760
      %v397 = vsub.f32 %v395, %v396
      %v398 = vand.u32 %v397, 4294901760
      %399 = vmatmul.f32.gmra.mxu0 %v398
      %v400 = vpop.f32.mrf.mxu0
      %v401 = vadd.f32 0.0, %v400
      %v402 = vand.u32 %v334, 4294901760
      %v403 = vsub.f32 %v334, %v402
      %v404 = vand.u32 %v403, 4294901760
      %v405 = vsub.f32 %v403, %v404
      %v406 = vand.u32 %v405, 4294901760
      %407 = vmatmul.f32.gmra.mxu0 %v406
      %v408 = vpop.f32.mrf.mxu0
      %v409 = vadd.f32 0.0, %v408
      %v410 = vand.u32 %v337, 4294901760
      %v411 = vsub.f32 %v337, %v410
      %v412 = vand.u32 %v411, 4294901760
      %v413 = vsub.f32 %v411, %v412
      %v414 = vand.u32 %v413, 4294901760
      %415 = vmatmul.f32.gmra.mxu0 %v414
      %v416 = vpop.f32.mrf.mxu0
      %v417 = vadd.f32 0.0, %v416
      %v418 = vand.u32 %v340, 4294901760
      %v419 = vsub.f32 %v340, %v418
      %v420 = vand.u32 %v419, 4294901760
      %v421 = vsub.f32 %v419, %v420
      %v422 = vand.u32 %v421, 4294901760
      %423 = vmatmul.f32.gmra.mxu0 %v422
      %v424 = vpop.f32.mrf.mxu0
      %v425 = vadd.f32 0.0, %v424
      %426 = vdwg.mxu0
      %427 = vmatpush.msra.mxu0 0.0
      %428 = vmatpush.msra.mxu0 0.0
      %429 = vmatpush.msra.mxu0 0.0
      %430 = vmatpush.msra.mxu0 0.0
      %431 = vmatpush.msra.mxu0 0.0
      %432 = vmatpush.msra.mxu0 0.0
      %433 = vmatpush.msra.mxu0 0.0
      %434 = vmatpush.msra.mxu0 0.0
      %435 = vmatpush.msra.mxu0 0.0
      %436 = vmatpush.msra.mxu0 0.0
      %437 = vmatpush.msra.mxu0 0.0
      %438 = vmatpush.msra.mxu0 0.0
      %v439 = vand.u32 %v317, 4294901760
      %v440 = vsub.f32 %v317, %v439
      %v441 = vand.u32 %v440, 4294901760
      %v442 = vsub.f32 %v440, %v441
      %v443 = vand.u32 %v442, 4294901760
      %444 = vmatpush.msra.mxu0 %v443
      %v445 = vand.u32 %v316, 4294901760
      %v446 = vsub.f32 %v316, %v445
      %v447 = vand.u32 %v446, 4294901760
      %v448 = vsub.f32 %v446, %v447
      %v449 = vand.u32 %v448, 4294901760
      %450 = vmatpush.msra.mxu0 %v449
      %v451 = vand.u32 %v315, 4294901760
      %v452 = vsub.f32 %v315, %v451
      %v453 = vand.u32 %v452, 4294901760
      %v454 = vsub.f32 %v452, %v453
      %v455 = vand.u32 %v454, 4294901760
      %456 = vmatpush.msra.mxu0 %v455
      %v457 = vand.u32 %v314, 4294901760
      %v458 = vsub.f32 %v314, %v457
      %v459 = vand.u32 %v458, 4294901760
      %v460 = vsub.f32 %v458, %v459
      %v461 = vand.u32 %v460, 4294901760
      %462 = vmatpush.msra.mxu0 %v461
      %v463 = vand.u32 %v319, 4294901760
      %464 = vmatmul.f32.gmra.mxu0 %v463
      %v465 = vpop.f32.mrf.mxu0
      %v466 = vadd.f32 %v369, %v465
      %v467 = vand.u32 %v322, 4294901760
      %468 = vmatmul.f32.gmra.mxu0 %v467
      %v469 = vpop.f32.mrf.mxu0
      %v470 = vadd.f32 %v377, %v469
      %v471 = vand.u32 %v325, 4294901760
      %472 = vmatmul.f32.gmra.mxu0 %v471
      %v473 = vpop.f32.mrf.mxu0
      %v474 = vadd.f32 %v385, %v473
      %v475 = vand.u32 %v328, 4294901760
      %476 = vmatmul.f32.gmra.mxu0 %v475
      %v477 = vpop.f32.mrf.mxu0
      %v478 = vadd.f32 %v393, %v477
      %v479 = vand.u32 %v331, 4294901760
      %480 = vmatmul.f32.gmra.mxu0 %v479
      %v481 = vpop.f32.mrf.mxu0
      %v482 = vadd.f32 %v401, %v481
      %v483 = vand.u32 %v334, 4294901760
      %484 = vmatmul.f32.gmra.mxu0 %v483
      %v485 = vpop.f32.mrf.mxu0
      %v486 = vadd.f32 %v409, %v485
      %v487 = vand.u32 %v337, 4294901760
      %488 = vmatmul.f32.gmra.mxu0 %v487
      %v489 = vpop.f32.mrf.mxu0
      %v490 = vadd.f32 %v417, %v489
      %v491 = vand.u32 %v340, 4294901760
      %492 = vmatmul.f32.gmra.mxu0 %v491
      %v493 = vpop.f32.mrf.mxu0
      %v494 = vadd.f32 %v425, %v493
      %495 = vdwg.mxu0
      %496 = vmatpush.msra.mxu0 0.0
      %497 = vmatpush.msra.mxu0 0.0
      %498 = vmatpush.msra.mxu0 0.0
      %499 = vmatpush.msra.mxu0 0.0
      %500 = vmatpush.msra.mxu0 0.0
      %501 = vmatpush.msra.mxu0 0.0
      %502 = vmatpush.msra.mxu0 0.0
      %503 = vmatpush.msra.mxu0 0.0
      %504 = vmatpush.msra.mxu0 0.0
      %505 = vmatpush.msra.mxu0 0.0
      %506 = vmatpush.msra.mxu0 0.0
      %507 = vmatpush.msra.mxu0 0.0
      %v508 = vand.u32 %v317, 4294901760
      %v509 = vsub.f32 %v317, %v508
      %510 = vmatpush.msra.mxu0 %v509
      %v511 = vand.u32 %v316, 4294901760
      %v512 = vsub.f32 %v316, %v511
      %513 = vmatpush.msra.mxu0 %v512
      %v514 = vand.u32 %v315, 4294901760
      %v515 = vsub.f32 %v315, %v514
      %516 = vmatpush.msra.mxu0 %v515
      %v517 = vand.u32 %v314, 4294901760
      %v518 = vsub.f32 %v314, %v517
      %519 = vmatpush.msra.mxu0 %v518
      %v520 = vand.u32 %v319, 4294901760
      %v521 = vsub.f32 %v319, %v520
      %522 = vmatmul.f32.gmra.mxu0 %v521
      %v523 = vpop.f32.mrf.mxu0
      %v524 = vadd.f32 %v466, %v523
      %v525 = vand.u32 %v322, 4294901760
      %v526 = vsub.f32 %v322, %v525
      %527 = vmatmul.f32.gmra.mxu0 %v526
      %v528 = vpop.f32.mrf.mxu0
      %v529 = vadd.f32 %v470, %v528
      %v530 = vand.u32 %v325, 4294901760
      %v531 = vsub.f32 %v325, %v530
      %532 = vmatmul.f32.gmra.mxu0 %v531
      %v533 = vpop.f32.mrf.mxu0
      %v534 = vadd.f32 %v474, %v533
      %v535 = vand.u32 %v328, 4294901760
      %v536 = vsub.f32 %v328, %v535
      %537 = vmatmul.f32.gmra.mxu0 %v536
      %v538 = vpop.f32.mrf.mxu0
      %v539 = vadd.f32 %v478, %v538
      %v540 = vand.u32 %v331, 4294901760
      %v541 = vsub.f32 %v331, %v540
      %542 = vmatmul.f32.gmra.mxu0 %v541
      %v543 = vpop.f32.mrf.mxu0
      %v544 = vadd.f32 %v482, %v543
      %v545 = vand.u32 %v334, 4294901760
      %v546 = vsub.f32 %v334, %v545
      %547 = vmatmul.f32.gmra.mxu0 %v546
      %v548 = vpop.f32.mrf.mxu0
      %v549 = vadd.f32 %v486, %v548
      %v550 = vand.u32 %v337, 4294901760
      %v551 = vsub.f32 %v337, %v550
      %552 = vmatmul.f32.gmra.mxu0 %v551
      %v553 = vpop.f32.mrf.mxu0
      %v554 = vadd.f32 %v490, %v553
      %v555 = vand.u32 %v340, 4294901760
      %v556 = vsub.f32 %v340, %v555
      %557 = vmatmul.f32.gmra.mxu0 %v556
      %v558 = vpop.f32.mrf.mxu0
      %v559 = vadd.f32 %v494, %v558
      %560 = vdwg.mxu0
      %561 = vmatpush.msra.mxu0 0.0
      %562 = vmatpush.msra.mxu0 0.0
      %563 = vmatpush.msra.mxu0 0.0
      %564 = vmatpush.msra.mxu0 0.0
      %565 = vmatpush.msra.mxu0 0.0
      %566 = vmatpush.msra.mxu0 0.0
      %567 = vmatpush.msra.mxu0 0.0
      %568 = vmatpush.msra.mxu0 0.0
      %569 = vmatpush.msra.mxu0 0.0
      %570 = vmatpush.msra.mxu0 0.0
      %571 = vmatpush.msra.mxu0 0.0
      %572 = vmatpush.msra.mxu0 0.0
      %v573 = vand.u32 %v317, 4294901760
      %574 = vmatpush.msra.mxu0 %v573
      %v575 = vand.u32 %v316, 4294901760
      %576 = vmatpush.msra.mxu0 %v575
      %v577 = vand.u32 %v315, 4294901760
      %578 = vmatpush.msra.mxu0 %v577
      %v579 = vand.u32 %v314, 4294901760
      %580 = vmatpush.msra.mxu0 %v579
      %v581 = vand.u32 %v319, 4294901760
      %v582 = vsub.f32 %v319, %v581
      %v583 = vand.u32 %v582, 4294901760
      %584 = vmatmul.f32.gmra.mxu0 %v583
      %v585 = vpop.f32.mrf.mxu0
      %v586 = vadd.f32 %v524, %v585
      %v587 = vand.u32 %v322, 4294901760
      %v588 = vsub.f32 %v322, %v587
      %v589 = vand.u32 %v588, 4294901760
      %590 = vmatmul.f32.gmra.mxu0 %v589
      %v591 = vpop.f32.mrf.mxu0
      %v592 = vadd.f32 %v529, %v591
      %v593 = vand.u32 %v325, 4294901760
      %v594 = vsub.f32 %v325, %v593
      %v595 = vand.u32 %v594, 4294901760
      %596 = vmatmul.f32.gmra.mxu0 %v595
      %v597 = vpop.f32.mrf.mxu0
      %v598 = vadd.f32 %v534, %v597
      %v599 = vand.u32 %v328, 4294901760
      %v600 = vsub.f32 %v328, %v599
      %v601 = vand.u32 %v600, 4294901760
      %602 = vmatmul.f32.gmra.mxu0 %v601
      %v603 = vpop.f32.mrf.mxu0
      %v604 = vadd.f32 %v539, %v603
      %v605 = vand.u32 %v331, 4294901760
      %v606 = vsub.f32 %v331, %v605
      %v607 = vand.u32 %v606, 4294901760
      %608 = vmatmul.f32.gmra.mxu0 %v607
      %v609 = vpop.f32.mrf.mxu0
      %v610 = vadd.f32 %v544, %v609
      %v611 = vand.u32 %v334, 4294901760
      %v612 = vsub.f32 %v334, %v611
      %v613 = vand.u32 %v612, 4294901760
      %614 = vmatmul.f32.gmra.mxu0 %v613
      %v615 = vpop.f32.mrf.mxu0
      %v616 = vadd.f32 %v549, %v615
      %v617 = vand.u32 %v337, 4294901760
      %v618 = vsub.f32 %v337, %v617
      %v619 = vand.u32 %v618, 4294901760
      %620 = vmatmul.f32.gmra.mxu0 %v619
      %v621 = vpop.f32.mrf.mxu0
      %v622 = vadd.f32 %v554, %v621
      %v623 = vand.u32 %v340, 4294901760
      %v624 = vsub.f32 %v340, %v623
      %v625 = vand.u32 %v624, 4294901760
      %626 = vmatmul.f32.gmra.mxu0 %v625
      %v627 = vpop.f32.mrf.mxu0
      %v628 = vadd.f32 %v559, %v627
      %629 = vdwg.mxu0
      %630 = vmatpush.msra.mxu0 0.0
      %631 = vmatpush.msra.mxu0 0.0
      %632 = vmatpush.msra.mxu0 0.0
      %633 = vmatpush.msra.mxu0 0.0
      %634 = vmatpush.msra.mxu0 0.0
      %635 = vmatpush.msra.mxu0 0.0
      %636 = vmatpush.msra.mxu0 0.0
      %637 = vmatpush.msra.mxu0 0.0
      %638 = vmatpush.msra.mxu0 0.0
      %639 = vmatpush.msra.mxu0 0.0
      %640 = vmatpush.msra.mxu0 0.0
      %641 = vmatpush.msra.mxu0 0.0
      %v642 = vand.u32 %v317, 4294901760
      %v643 = vsub.f32 %v317, %v642
      %v644 = vand.u32 %v643, 4294901760
      %645 = vmatpush.msra.mxu0 %v644
      %v646 = vand.u32 %v316, 4294901760
      %v647 = vsub.f32 %v316, %v646
      %v648 = vand.u32 %v647, 4294901760
      %649 = vmatpush.msra.mxu0 %v648
      %v650 = vand.u32 %v315, 4294901760
      %v651 = vsub.f32 %v315, %v650
      %v652 = vand.u32 %v651, 4294901760
      %653 = vmatpush.msra.mxu0 %v652
      %v654 = vand.u32 %v314, 4294901760
      %v655 = vsub.f32 %v314, %v654
      %v656 = vand.u32 %v655, 4294901760
      %657 = vmatpush.msra.mxu0 %v656
      %v658 = vand.u32 %v319, 4294901760
      %659 = vmatmul.f32.gmra.mxu0 %v658
      %v660 = vpop.f32.mrf.mxu0
      %v661 = vadd.f32 %v586, %v660
      %v662 = vand.u32 %v322, 4294901760
      %663 = vmatmul.f32.gmra.mxu0 %v662
      %v664 = vpop.f32.mrf.mxu0
      %v665 = vadd.f32 %v592, %v664
      %v666 = vand.u32 %v325, 4294901760
      %667 = vmatmul.f32.gmra.mxu0 %v666
      %v668 = vpop.f32.mrf.mxu0
      %v669 = vadd.f32 %v598, %v668
      %v670 = vand.u32 %v328, 4294901760
      %671 = vmatmul.f32.gmra.mxu0 %v670
      %v672 = vpop.f32.mrf.mxu0
      %v673 = vadd.f32 %v604, %v672
      %v674 = vand.u32 %v331, 4294901760
      %675 = vmatmul.f32.gmra.mxu0 %v674
      %v676 = vpop.f32.mrf.mxu0
      %v677 = vadd.f32 %v610, %v676
      %v678 = vand.u32 %v334, 4294901760
      %679 = vmatmul.f32.gmra.mxu0 %v678
      %v680 = vpop.f32.mrf.mxu0
      %v681 = vadd.f32 %v616, %v680
      %v682 = vand.u32 %v337, 4294901760
      %683 = vmatmul.f32.gmra.mxu0 %v682
      %v684 = vpop.f32.mrf.mxu0
      %v685 = vadd.f32 %v622, %v684
      %v686 = vand.u32 %v340, 4294901760
      %687 = vmatmul.f32.gmra.mxu0 %v686
      %v688 = vpop.f32.mrf.mxu0
      %v689 = vadd.f32 %v628, %v688
      %690 = vdwg.mxu0
      %691 = vmatpush.msra.mxu0 0.0
      %692 = vmatpush.msra.mxu0 0.0
      %693 = vmatpush.msra.mxu0 0.0
      %694 = vmatpush.msra.mxu0 0.0
      %695 = vmatpush.msra.mxu0 0.0
      %696 = vmatpush.msra.mxu0 0.0
      %697 = vmatpush.msra.mxu0 0.0
      %698 = vmatpush.msra.mxu0 0.0
      %699 = vmatpush.msra.mxu0 0.0
      %700 = vmatpush.msra.mxu0 0.0
      %701 = vmatpush.msra.mxu0 0.0
      %702 = vmatpush.msra.mxu0 0.0
      %v703 = vand.u32 %v317, 4294901760
      %704 = vmatpush.msra.mxu0 %v703
      %v705 = vand.u32 %v316, 4294901760
      %706 = vmatpush.msra.mxu0 %v705
      %v707 = vand.u32 %v315, 4294901760
      %708 = vmatpush.msra.mxu0 %v707
      %v709 = vand.u32 %v314, 4294901760
      %710 = vmatpush.msra.mxu0 %v709
      %v711 = vand.u32 %v319, 4294901760
      %712 = vmatmul.f32.gmra.mxu0 %v711
      %v713 = vpop.f32.mrf.mxu0
      %v714 = vadd.f32 %v661, %v713
      %v715 = vand.u32 %v322, 4294901760
      %716 = vmatmul.f32.gmra.mxu0 %v715
      %v717 = vpop.f32.mrf.mxu0
      %v718 = vadd.f32 %v665, %v717
      %v719 = vand.u32 %v325, 4294901760
      %720 = vmatmul.f32.gmra.mxu0 %v719
      %v721 = vpop.f32.mrf.mxu0
      %v722 = vadd.f32 %v669, %v721
      %v723 = vand.u32 %v328, 4294901760
      %724 = vmatmul.f32.gmra.mxu0 %v723
      %v725 = vpop.f32.mrf.mxu0
      %v726 = vadd.f32 %v673, %v725
      %v727 = vand.u32 %v331, 4294901760
      %728 = vmatmul.f32.gmra.mxu0 %v727
      %v729 = vpop.f32.mrf.mxu0
      %v730 = vadd.f32 %v677, %v729
      %v731 = vand.u32 %v334, 4294901760
      %732 = vmatmul.f32.gmra.mxu0 %v731
      %v733 = vpop.f32.mrf.mxu0
      %v734 = vadd.f32 %v681, %v733
      %v735 = vand.u32 %v337, 4294901760
      %736 = vmatmul.f32.gmra.mxu0 %v735
      %v737 = vpop.f32.mrf.mxu0
      %v738 = vadd.f32 %v685, %v737
      %v739 = vand.u32 %v340, 4294901760
      %740 = vmatmul.f32.gmra.mxu0 %v739
      %v741 = vpop.f32.mrf.mxu0
      %v742 = vadd.f32 %v689, %v741
      %743 = vdwg.mxu0
      %v744 = vmul.f32 %v714, %v714
      %v745 = vmul.f32 %v718, %v718
      %v746 = vmul.f32 %v722, %v722
      %v747 = vmul.f32 %v726, %v726
      %v748 = vmul.f32 %v730, %v730
      %v749 = vmul.f32 %v734, %v734
      %v750 = vmul.f32 %v738, %v738
      %v751 = vmul.f32 %v742, %v742
      %vm752 = vcmask 64512
      %v753 = vsel %vm752, %v744, 0.0
      %754 = vadd.xlane.f32.xlu0 %v753
      %v755 = vpop.xlane.xlu0 %754
      %v756 = vsel %vm752, %v745, 0.0
      %757 = vadd.xlane.f32.xlu0 %v756
      %v758 = vpop.xlane.xlu0 %757
      %v759 = vsel %vm752, %v746, 0.0
      %760 = vadd.xlane.f32.xlu0 %v759
      %v761 = vpop.xlane.xlu0 %760
      %v762 = vsel %vm752, %v747, 0.0
      %763 = vadd.xlane.f32.xlu0 %v762
      %v764 = vpop.xlane.xlu0 %763
      %v765 = vsel %vm752, %v748, 0.0
      %766 = vadd.xlane.f32.xlu0 %v765
      %v767 = vpop.xlane.xlu0 %766
      %v768 = vsel %vm752, %v749, 0.0
      %769 = vadd.xlane.f32.xlu0 %v768
      %v770 = vpop.xlane.xlu0 %769
      %v771 = vsel %vm752, %v750, 0.0
      %772 = vadd.xlane.f32.xlu0 %v771
      %v773 = vpop.xlane.xlu0 %772
      %v774 = vsel %vm752, %v751, 0.0
      %775 = vadd.xlane.f32.xlu0 %v774
      %v776 = vpop.xlane.xlu0 %775
      %v777 = vmul.f32 %v306, %v306
      %v778 = vmul.f32 %v307, %v307
      %v779 = vmul.f32 %v308, %v308
      %v780 = vmul.f32 %v309, %v309
      %v781 = vmul.f32 %v310, %v310
      %v782 = vmul.f32 %v311, %v311
      %v783 = vmul.f32 %v312, %v312
      %v784 = vmul.f32 %v313, %v313
      %v785 = vsel %vm271, %v777, 0.0
      %786 = vadd.xlane.f32.xlu0 %v785
      %v787 = vpop.xlane.xlu0 %786
      %v788 = vsel %vm271, %v778, 0.0
      %789 = vadd.xlane.f32.xlu0 %v788
      %v790 = vpop.xlane.xlu0 %789
      %v791 = vsel %vm271, %v779, 0.0
      %792 = vadd.xlane.f32.xlu0 %v791
      %v793 = vpop.xlane.xlu0 %792
      %v794 = vsel %vm271, %v780, 0.0
      %795 = vadd.xlane.f32.xlu0 %v794
      %v796 = vpop.xlane.xlu0 %795
      %v797 = vsel %vm271, %v781, 0.0
      %798 = vadd.xlane.f32.xlu0 %v797
      %v799 = vpop.xlane.xlu0 %798
      %v800 = vsel %vm271, %v782, 0.0
      %801 = vadd.xlane.f32.xlu0 %v800
      %v802 = vpop.xlane.xlu0 %801
      %v803 = vsel %vm271, %v783, 0.0
      %804 = vadd.xlane.f32.xlu0 %v803
      %v805 = vpop.xlane.xlu0 %804
      %v806 = vsel %vm271, %v784, 0.0
      %807 = vadd.xlane.f32.xlu0 %v806
      %v808 = vpop.xlane.xlu0 %807
      %v809 = vsub.f32 %v755, %v787
      %v810 = vsub.f32 %v758, %v790
      %v811 = vsub.f32 %v761, %v793
      %v812 = vsub.f32 %v764, %v796
      %v813 = vsub.f32 %v767, %v799
      %v814 = vsub.f32 %v770, %v802
      %v815 = vsub.f32 %v773, %v805
      %v816 = vsub.f32 %v776, %v808
      %v817 = vmul.f32 %v809, 0.5
      %v818 = vmul.f32 %v810, 0.5
      %v819 = vmul.f32 %v811, 0.5
      %v820 = vmul.f32 %v812, 0.5
      %v821 = vmul.f32 %v813, 0.5
      %v822 = vmul.f32 %v814, 0.5
      %v823 = vmul.f32 %v815, 0.5
      %v824 = vmul.f32 %v816, 0.5
      %v825 = vadd.f32 %v298, %v817
      %v826 = vadd.f32 %v299, %v818
      %v827 = vadd.f32 %v300, %v819
      %v828 = vadd.f32 %v301, %v820
      %v829 = vadd.f32 %v302, %v821
      %v830 = vadd.f32 %v303, %v822
      %v831 = vadd.f32 %v304, %v823
      %v832 = vadd.f32 %v305, %v824
      %vm833 = vcmask 7168
      %834 = vst.msk [vmem:[%s249] sm:$0xff] %vm833, %v825
      %835 = vst.msk [vmem:[%s249 + $0x8] sm:$0xff] %vm833, %v826
      %836 = vst.msk [vmem:[%s249 + $0x10] sm:$0xff] %vm833, %v827
      %837 = vst.msk [vmem:[%s249 + $0x18] sm:$0xff] %vm833, %v828
      %838 = vst.msk [vmem:[%s249 + $0x20] sm:$0xff] %vm833, %v829
      %839 = vst.msk [vmem:[%s249 + $0x28] sm:$0xff] %vm833, %v830
      %840 = vst.msk [vmem:[%s249 + $0x30] sm:$0xff] %vm833, %v831
      %841 = vst.msk [vmem:[%s249 + $0x38] sm:$0xff] %vm833, %v832
      %s842 = smul.u32 8, %s17
      %p843 = scmp.lt.s32.totalorder %s842, 15
      %s844 = scalar_select %p843, %s842, 15
      %s845 = smul.addr %s844, 8
      %s846 = scalar_lea.vmem %s5, %s845
      // Predicated region
      $region41: #{fm_component.1} parent=39 // pred_check
        %p847 = pneg %p150
      $region42: #{fm_component.1} parent=39 // pred_check_branch
        %849 = sbr.rel (%p847) target = $region44
      $region43: #{fm_component.1} parent=39 // pred_region
        %s850 = smul.u32 8, %s17
      $region44: #{fm_component.1} parent=39 // pred_fallthru
        _
    $region40: #{fm_component.1} parent=5 // pred_fallthru
      _
    %p851 = scmp.le.s32.totalorder 2, %s12
    // Predicated region
    $region45: #{fm_component.1} parent=5 // pred_check
      %p852 = pneg %p851
    $region46: #{fm_component.1} parent=5 // pred_check_branch
      %854 = sbr.rel (%p852) target = $region48
    $region47: #{fm_component.1} parent=5 // pred_region
      %s855 = ssub.s32 %s12, 2
      // Predicated region
      $region49: #{fm_component.1} parent=47 // pred_check
        %p856 = pneg %p156
      $region50: #{fm_component.1} parent=47 // pred_check_branch
        %858 = sbr.rel (%p856) target = $region52
      $region51: #{fm_component.1} parent=47 // pred_region
        %s859 = smul.u32 8, %s18
        %p860 = scmp.lt.s32.totalorder %s859, 15
        %s861 = scalar_select %p860, %s859, 15
        %s862 = smul.addr %s861, 8
        %s863 = scalar_lea.vmem %s5, %s862
      $region52: #{fm_component.1} parent=47 // pred_fallthru
        _
    $region48: #{fm_component.1} parent=5 // pred_fallthru
      _
  $region6: #{fm_component.1} parent=0 // loop_footer
    %s16 = sadd.s32 1, %s12
  $region7: #{fm_component.1} parent=0 // loop_footer_branch
    %11 = sbr.rel target = $region3
  $region8: #{fm_component.1} parent=0 // loop_exit
    _

</llo_original>
